<compile_context>
chip_gen: v6e
topology: v6e:2x2x1
jax: 0.10.0
libtpu: 0.0.40
codegen_flags: <defaults>
</compile_context>

<pallas_src>
import jax
import jax.numpy as jnp
from jax.experimental import pallas as pl
from jax.experimental.pallas import tpu as pltpu

LANE = 128
SUBLANE = 8

MAX_BATCH_TILE = 2048      # 256 was overhead-bound (~0.35 us/step vs ~0.1 us of DMA)
SMALL_BATCH_ROWS = 512     # below this: single grid step + lane-padded unmasked store
TINY_BATCH_ROWS = 64       # below this (opt-in): plain fused XLA matmul beats launch floor
VMEM_TILE_BUDGET = 8 << 20 # keep double-buffered obs+out tiles << 32 MiB scoped VMEM (v7x)


def _round_up(x, m):
    return (x + m - 1) // m * m


def fused_actor_kernel(obs_ref, w_ref, b_ref, out_ref):
    # [TB, D_obs] @ [D_obs, N] + [1, N] -> single MXU push, f32 accumulate.
    # Bias add is a (1, N) sublane broadcast; negligible next to the DMA cost.
    acc = jnp.dot(obs_ref[...], w_ref[...], preferred_element_type=jnp.float32)
    out_ref[...] = (acc + b_ref[...]).astype(out_ref.dtype)


def fuse_actor_params(params):
    """Collapse the 3 activation-free linear layers into one affine map.

    Done once, outside the per-call hot path. Returns both the narrow
    ([D_obs, dim_action]) fused weight/bias (used for large, DMA-bound batches)
    and a lane-padded (128-wide) copy (used for small, overhead-bound batches
    where an unmasked vst matters more than HBM bytes).
    """
    w1, b1 = params["w1"], params["b1"]
    w2, b2 = params["w2"], params["b2"]
    w3, b3 = params["w3"], params["b3"]

    w = w1 @ w2 @ w3                      # [D_obs, dim_action]
    b = (b1 @ w2 + b2) @ w3 + b3          # [1,      dim_action]
    dim_action = w3.shape[1]

    n_pad = _round_up(dim_action, LANE)
    pad = n_pad - dim_action
    w_lane = jnp.pad(w, ((0, 0), (0, pad))) if pad else w
    b_lane = jnp.pad(b, ((0, 0), (0, pad))) if pad else b

    return {"w": w, "b": b, "w_lane": w_lane, "b_lane": b_lane,
            "dim_action": dim_action}


def actor_forward(obs, fused, *, small_batch_xla_fallback=False):
    """obs: [B, dim_observation] float32. `fused` from fuse_actor_params."""
    dim_action = fused["dim_action"]
    B, d_obs = obs.shape

    # Tiny-batch regime is pure fixed overhead (custom call + 4 DMAs); no
    # kernel-internal change beats it. Opt-in fallback to one fused XLA matmul.
    if small_batch_xla_fallback and B <= TINY_BATCH_ROWS:
        return obs @ fused["w"] + fused["b"]

    b8 = _round_up(B, SUBLANE)
    narrow_output = b8 >= SMALL_BATCH_ROWS

    if narrow_output:
        # DMA-bound regime: store only the real dim_action columns (masked vst,
        # but ~16x fewer HBM writeback bytes), and force >= 2 grid steps so the
        # "parallel" axis can shard across both TensorCores on v7x.
        w, b = fused["w"], fused["b"]
        tb = min(MAX_BATCH_TILE, _round_up(pl.cdiv(b8, 2), SUBLANE))
    else:
        # Overhead-bound regime: one grid step, lane-dense 128-wide output so
        # the store path stays unmasked; padding cost is negligible at small B.
        w, b = fused["w_lane"], fused["b_lane"]
        tb = b8

    n_out = w.shape[1]
    itemsize = obs.dtype.itemsize

    # VMEM sanity cap: double-buffered obs+out tiles must stay well below the
    # scoped default (32 MiB on v7x, whose physical VMEM is only 64 MiB).
    bytes_per_row = 2 * (d_obs + n_out) * itemsize      # x2 for double buffering
    vmem_cap = max(SUBLANE, (VMEM_TILE_BUDGET // bytes_per_row) // SUBLANE * SUBLANE)
    tb = min(tb, vmem_cap)

    b_pad = _round_up(b8, tb)
    if b_pad != B:
        obs = jnp.pad(obs, ((0, b_pad - B), (0, 0)))

    # Honest, advisory cost estimate: flops against the real dim_action, bytes
    # from the arrays actually DMA'd, real dtype size.
    cost = pl.CostEstimate(
        flops=2 * b_pad * d_obs * dim_action + b_pad * dim_action,
        transcendentals=0,
        bytes_accessed=(obs.size + w.size + b.size + b_pad * n_out) * itemsize,
    )

    out = pl.pallas_call(
        fused_actor_kernel,
        out_shape=jax.ShapeDtypeStruct((b_pad, n_out), obs.dtype),
        grid_spec=pltpu.PrefetchScalarGridSpec(
            num_scalar_prefetch=0,
            grid=(b_pad // tb,),
            in_specs=[
                # obs streams over the batch grid axis (auto double-buffered).
                pl.BlockSpec((tb, d_obs), lambda i: (i, 0)),
                # Constant-index blocks: the pipeline elides re-fetch across
                # grid steps, so the fused weight/bias stay VMEM-resident.
                pl.BlockSpec((d_obs, n_out), lambda i: (0, 0)),
                pl.BlockSpec((1, n_out), lambda i: (0, 0)),
            ],
            out_specs=pl.BlockSpec((tb, n_out), lambda i: (i, 0)),
        ),
        compiler_params=pltpu.CompilerParams(
            dimension_semantics=("parallel",),  # megacore / v7x 2-TC sharding
        ),
        cost_estimate=cost,
    )(obs, w, b)

    # Narrow path usually returns the kernel output directly (no extra HBM pass).
    if b_pad != B or n_out != dim_action:
        out = out[:B, :dim_action]
    return out


def init_actor_params(dim_observation, dim_action, key):
    """Deterministic init mimicking nn.Linear's U(-1/sqrt(fan_in), 1/sqrt(fan_in)).

    Weights stored as [in, out] (transposed vs. PyTorch) so y = x @ W + b."""
    def linear(key, fan_in, fan_out):
        kw, kb = jax.random.split(key)
        bound = 1.0 / jnp.sqrt(fan_in)
        w = jax.random.uniform(kw, (fan_in, fan_out), jnp.float32, -bound, bound)
        b = jax.random.uniform(kb, (1, fan_out), jnp.float32, -bound, bound)
        return w, b

    k1, k2, k3 = jax.random.split(key, 3)
    w1, b1 = linear(k1, dim_observation, 200)
    w2, b2 = linear(k2, 200, 128)
    w3, b3 = linear(k3, 128, dim_action)
    return {"w1": w1, "b1": b1, "w2": w2, "b2": b2, "w3": w3, "b3": b3}


def actor_reference(obs, params):
    """Pure-JAX layer-by-layer reference (matches the PyTorch forward)."""
    h = obs @ params["w1"] + params["b1"]
    h = h @ params["w2"] + params["b2"]
    h = h @ params["w3"] + params["b3"]
    return h


if __name__ == "__main__":
    dim_observation = 32
    dim_action = 8

    key = jax.random.PRNGKey(0)
    k_obs_small, k_obs_big, k_params = jax.random.split(key, 3)

    params = init_actor_params(dim_observation, dim_action, k_params)
    fused = fuse_actor_params(params)            # one-time algebraic fusion

    # Small batch: overhead-bound path (single grid step, lane-padded store).
    obs_small = jax.random.normal(k_obs_small, (2, dim_observation), jnp.float32)
    out_small = jax.block_until_ready(actor_forward(obs_small, fused))
    ref_small = actor_reference(obs_small, params)
    assert out_small.shape == (2, dim_action), out_small.shape
    assert jnp.allclose(out_small, ref_small, atol=1e-4, rtol=1e-4), (
        f"small-batch max abs err {jnp.max(jnp.abs(out_small - ref_small))}"
    )

    # Larger batch: DMA-bound path (>= 2 grid steps, narrow dim_action-wide store).
    obs_big = jax.random.normal(k_obs_big, (1040, dim_observation), jnp.float32)
    out_big = jax.block_until_ready(actor_forward(obs_big, fused))
    ref_big = actor_reference(obs_big, params)
    assert out_big.shape == (1040, dim_action), out_big.shape
    assert jnp.allclose(out_big, ref_big, atol=1e-4, rtol=1e-4), (
        f"large-batch max abs err {jnp.max(jnp.abs(out_big - ref_big))}"
    )

    print("KERNEL_OK")
</pallas_src>

<mosaic_0001>
module attributes {stable_mosaic.version = 11 : i64} {
  func.func @fused_actor_kernel(%arg0: i32, %arg1: memref<8x32xf32, #tpu.memory_space<vmem>>, %arg2: memref<32x128xf32, #tpu.memory_space<vmem>>, %arg3: memref<1x128xf32, #tpu.memory_space<vmem>>, %arg4: memref<8x128xf32, #tpu.memory_space<vmem>>) attributes {dimension_semantics = [#tpu.dimension_semantics<parallel>], iteration_bounds = array<i64: 1>, scalar_prefetch = 0 : i64, scratch_operands = 0 : i64, tpu.core_type = #tpu.core_type<tc>, window_params = [{transform_indices = @transform_0, window_bounds = array<i64: 8, 32>}, {pipeline_mode = #tpu.pipeline_mode<synchronous>, transform_indices = @transform_1, window_bounds = array<i64: 32, 128>}, {pipeline_mode = #tpu.pipeline_mode<synchronous>, transform_indices = @transform_2, window_bounds = array<i64: 1, 128>}, {transform_indices = @transform_3, window_bounds = array<i64: 8, 128>}]} {
    %c0 = arith.constant 0 : index
    %c0_0 = arith.constant 0 : index
    %0 = vector.load %arg1[%c0, %c0_0] : memref<8x32xf32, #tpu.memory_space<vmem>>, vector<8x32xf32>
    %c0_1 = arith.constant 0 : index
    %c0_2 = arith.constant 0 : index
    %1 = vector.load %arg2[%c0_1, %c0_2] : memref<32x128xf32, #tpu.memory_space<vmem>>, vector<32x128xf32>
    %cst = arith.constant dense<0.000000e+00> : vector<8x128xf32>
    %2 = tpu.matmul %0, %1, %cst {dimension_numbers = #tpu.dot_dimension_numbers<[1], [0], [0], [1], [0, 0, 1, 1], [], []>} : vector<8x32xf32>, vector<32x128xf32>, vector<8x128xf32> -> vector<8x128xf32>
    %c0_3 = arith.constant 0 : index
    %c0_4 = arith.constant 0 : index
    %3 = vector.load %arg3[%c0_3, %c0_4] : memref<1x128xf32, #tpu.memory_space<vmem>>, vector<1x128xf32>
    %4 = vector.broadcast %3 : vector<1x128xf32> to vector<8x128xf32>
    %5 = arith.addf %2, %4 : vector<8x128xf32>
    %c0_5 = arith.constant 0 : index
    %c0_6 = arith.constant 0 : index
    %6 = vector.load %arg4[%c0_5, %c0_6] : memref<8x128xf32, #tpu.memory_space<vmem>>, vector<8x128xf32>
    tpu.vector_store %arg4[%c0_5, %c0_6], %5 {strides = array<i32>} : memref<8x128xf32, #tpu.memory_space<vmem>>, vector<8x128xf32>,
    return
  }
  func.func @transform_0(%arg0: i32) -> (i32, i32) {
    %c0_i32 = arith.constant 0 : i32
    %c0_i32_0 = arith.constant 0 : i32
    return %arg0, %c0_i32 : i32, i32
  }
  func.func @transform_1(%arg0: i32) -> (i32, i32) {
    %c0_i32 = arith.constant 0 : i32
    %c0_i32_0 = arith.constant 0 : i32
    %c0_i32_1 = arith.constant 0 : i32
    return %c0_i32, %c0_i32_0 : i32, i32
  }
  func.func @transform_2(%arg0: i32) -> (i32, i32) {
    %c0_i32 = arith.constant 0 : i32
    %c0_i32_0 = arith.constant 0 : i32
    %c0_i32_1 = arith.constant 0 : i32
    return %c0_i32, %c0_i32_0 : i32, i32
  }
  func.func @transform_3(%arg0: i32) -> (i32, i32) {
    %c0_i32 = arith.constant 0 : i32
    %c0_i32_0 = arith.constant 0 : i32
    return %arg0, %c0_i32 : i32, i32
  }
}

</mosaic_0001>

<llo_original>
// kernel: tpu_custom_call.1
$region0: #{tpu_custom_call.1}
  #allocation0 [shape = 'u32[]', space=smem, size = 0x4, offset = 0x4, fixed_abs, tag = 'smem constant byte address 0x4 - core index']
  #allocation1 [shape = 'u32[144,128]{1,0:T(1,128)}', space=vmem, size = 0x12000, scoped, tag = 'internal scratch']
  %s0 = inlined_call_operand.hbm [shape: f32[8,32], index: 0, kind: input, shape index: {}]
  %s1 = inlined_call_operand.hbm [shape: f32[32,128], index: 1, kind: input, shape index: {}]
  %s2 = inlined_call_operand.vmem [shape: f32[1,128], index: 2, kind: input, shape index: {}]
  %s3 = inlined_call_operand.hbm [shape: f32[8,128], index: 3, kind: output, shape index: {}]
  %s4 = sld [smem:[#allocation0]]
  $region30: #{tpu_custom_call.1} parent=0
    _
  %s6 = ssub.s32 1, %s4
  %s7 = scalar_select 0, %s6, %s4
  $region1: #{tpu_custom_call.1} parent=0
    #allocation2 [shape = 'u8[4096]{0}', space=vmem, size = 0x1000, scoped, tag = 'input window, operand 0, single buffered']
    #allocation3 [shape = 's32[1]{0}', space=sflag, size = 0x4, scoped, tag = 'scoped memory for tpu_custom_call.1']
    #allocation4 [shape = 's32[1]{0}', space=sflag, size = 0x4, scoped, tag = 'scoped memory for tpu_custom_call.1']
    #allocation5 [shape = 'u8[16384]{0}', space=vmem, size = 0x4000, scoped, tag = 'input window, operand 1, single buffered']
    #allocation6 [shape = 's32[1]{0}', space=sflag, size = 0x4, scoped, tag = 'scoped memory for tpu_custom_call.1']
    #allocation7 [shape = 'u8[4096]{0}', space=vmem, size = 0x1000, scoped, tag = 'output window, operand 0, single buffered']
    %8 = vsyncpa [#allocation3], 0
    %9 = vsyncpa [#allocation6], 0
    %10 = vsyncpa [#allocation4], 0
    // Predicated region
    $region2: #{tpu_custom_call.1} parent=1 // pred_check
      _
    $region3: #{tpu_custom_call.1} parent=1 // pred_check_branch
      %12 = sbr.rel (0) target = $region5
    $region4: #{tpu_custom_call.1} parent=1 // pred_region
      %s14 = ssub.s32 128, 128
      %15 = vsyncadd [#allocation3], %s14
      %s17 = sshll.u32 [#allocation2], 4
      %s18 = int_to_ptr.vmem [resolvable:$true] %s17
      %20 = dma.hbm_to_vmem [thread:$0]  %s0, 128, %s18, [#allocation3]
    $region5: #{tpu_custom_call.1} parent=1 // pred_fallthru
      _
    // Predicated region
    $region6: #{tpu_custom_call.1} parent=1 // pred_check
      _
    $region7: #{tpu_custom_call.1} parent=1 // pred_check_branch
      %22 = sbr.rel (0) target = $region9
    $region8: #{tpu_custom_call.1} parent=1 // pred_region
      %s24 = ssub.s32 512, 512
      %25 = vsyncadd [#allocation6], %s24
      %s26 = sshll.u32 [#allocation5], 4
      %s27 = int_to_ptr.vmem [resolvable:$true] %s26
      %32 = dma.hbm_to_vmem [thread:$0]  %s1, 512, %s27, [#allocation6], 128, 128, 8
    $region9: #{tpu_custom_call.1} parent=1 // pred_fallthru
      _
    // Predicated region
    $region10: #{tpu_custom_call.1} parent=1 // pred_check
      _
    $region11: #{tpu_custom_call.1} parent=1 // pred_check_branch
      %34 = sbr.rel (0) target = $region13
    $region12: #{tpu_custom_call.1} parent=1 // pred_region
      _
    $region13: #{tpu_custom_call.1} parent=1 // pred_fallthru
      _
    // Predicated region
    $region14: #{tpu_custom_call.1} parent=1 // pred_check
      _
    $region15: #{tpu_custom_call.1} parent=1 // pred_check_branch
      %36 = sbr.rel (0) target = $region17
    $region16: #{tpu_custom_call.1} parent=1 // pred_region
      %37 = dma.done [#allocation3], 128
    $region17: #{tpu_custom_call.1} parent=1 // pred_fallthru
      _
    // Predicated region
    $region18: #{tpu_custom_call.1} parent=1 // pred_check
      _
    $region19: #{tpu_custom_call.1} parent=1 // pred_check_branch
      %39 = sbr.rel (0) target = $region21
    $region20: #{tpu_custom_call.1} parent=1 // pred_region
      %40 = dma.done [#allocation6], 512
    $region21: #{tpu_custom_call.1} parent=1 // pred_fallthru
      _
    %v41 = vld [vmem:[#allocation2] sm:$0xff]
    %v42 = vld [vmem:[#allocation5] sm:$0xff]
    %v43 = vld [vmem:[#allocation5 + $0x8] sm:$0xff]
    %v44 = vld [vmem:[#allocation5 + $0x10] sm:$0xff]
    %v45 = vld [vmem:[#allocation5 + $0x18] sm:$0xff]
    %v46 = vld [vmem:[%s2] sm:$0x1]
    %v48 = vlaneseq
    %v49 = vshrl.u32 %v48, 7
    %v50 = vsub.s32 0, %v49
    %v51 = vrot.slane %v46, %v50
    %vm53 = vcmask 261120
    %v55 = vsel %vm53, %v41, 0
    %57 = vmatprep.subr.mxu0 0.0
    %58 = vmatpush1.msra.mxu0 0.0
    %59 = vmatprep.subr.mxu0 0.0
    %60 = vmatpush1.msra.mxu0 0.0
    %61 = vmatprep.subr.mxu0 0.0
    %62 = vmatpush1.msra.mxu0 0.0
    %63 = vmatprep.subr.mxu0 0.0
    %64 = vmatpush1.msra.mxu0 0.0
    %65 = vmatprep.subr.mxu0 0.0
    %66 = vmatpush1.msra.mxu0 0.0
    %67 = vmatprep.subr.mxu0 0.0
    %68 = vmatpush1.msra.mxu0 0.0
    %69 = vmatprep.subr.mxu0 0.0
    %70 = vmatpush1.msra.mxu0 0.0
    %71 = vmatprep.subr.mxu0 0.0
    %72 = vmatpush1.msra.mxu0 0.0
    %73 = vmatprep.subr.mxu0 0.0
    %74 = vmatpush1.msra.mxu0 0.0
    %75 = vmatprep.subr.mxu0 0.0
    %76 = vmatpush1.msra.mxu0 0.0
    %77 = vmatprep.subr.mxu0 0.0
    %78 = vmatpush1.msra.mxu0 0.0
    %79 = vmatprep.subr.mxu0 0.0
    %80 = vmatpush1.msra.mxu0 0.0
    %81 = vmatprep.subr.mxu0 0.0
    %82 = vmatpush1.msra.mxu0 %v45
    %83 = vmatprep.subr.mxu0 0.0
    %84 = vmatpush1.msra.mxu0 %v44
    %85 = vmatprep.subr.mxu0 0.0
    %86 = vmatpush1.msra.mxu0 %v43
    %87 = vmatprep.subr.mxu0 0.0
    %88 = vmatpush1.msra.mxu0 %v42
    %89 = vmatprep.subr.mxu0 0.0
    %90 = vmatpush2.msra.mxu0 0.0
    %91 = vmatprep.subr.mxu0 0.0
    %92 = vmatpush2.msra.mxu0 0.0
    %93 = vmatprep.subr.mxu0 0.0
    %94 = vmatpush2.msra.mxu0 0.0
    %95 = vmatprep.subr.mxu0 0.0
    %96 = vmatpush2.msra.mxu0 0.0
    %97 = vmatprep.subr.mxu0 0.0
    %98 = vmatpush2.msra.mxu0 0.0
    %99 = vmatprep.subr.mxu0 0.0
    %100 = vmatpush2.msra.mxu0 0.0
    %101 = vmatprep.subr.mxu0 0.0
    %102 = vmatpush2.msra.mxu0 0.0
    %103 = vmatprep.subr.mxu0 0.0
    %104 = vmatpush2.msra.mxu0 0.0
    %105 = vmatprep.subr.mxu0 0.0
    %106 = vmatpush2.msra.mxu0 0.0
    %107 = vmatprep.subr.mxu0 0.0
    %108 = vmatpush2.msra.mxu0 0.0
    %109 = vmatprep.subr.mxu0 0.0
    %110 = vmatpush2.msra.mxu0 0.0
    %111 = vmatprep.subr.mxu0 0.0
    %112 = vmatpush2.msra.mxu0 0.0
    %113 = vmatprep.subr.mxu0 0.0
    %114 = vmatpush2.msra.mxu0 0.0
    %115 = vmatprep.subr.mxu0 0.0
    %116 = vmatpush2.msra.mxu0 0.0
    %117 = vmatprep.subr.mxu0 0.0
    %118 = vmatpush2.msra.mxu0 0.0
    %119 = vmatprep.subr.mxu0 0.0
    %120 = vmatpush2.msra.mxu0 0.0
    %121 = vmatprep.mubr.f32.mxu0 0.0
    %122 = vmatmul.mubr.f32.gmra.mxu0 %v55
    %v123 = vpop.f32.mrf.mxu0
    %v124 = vadd.f32 %v51, %v123
    %v125 = vpop.f32.mrf.mxu0
    %126 = vdwg.mxu0
    %127 = vst [vmem:[#allocation7] sm:$0xff] %v124
    // Predicated region
    $region22: #{tpu_custom_call.1} parent=1 // pred_check
      _
    $region23: #{tpu_custom_call.1} parent=1 // pred_check_branch
      %129 = sbr.rel (0) target = $region25
    $region24: #{tpu_custom_call.1} parent=1 // pred_region
      %s131 = ssub.s32 128, 128
      %132 = vsyncadd [#allocation4], %s131
      %s134 = sshll.u32 [#allocation7], 4
      %s135 = int_to_ptr.vmem [resolvable:$true] %s134
      %137 = dma.vmem_to_hbm [thread:$0]  %s135, 128, %s3, [#allocation4]
    $region25: #{tpu_custom_call.1} parent=1 // pred_fallthru
      _
    // Predicated region
    $region26: #{tpu_custom_call.1} parent=1 // pred_check
      _
    $region27: #{tpu_custom_call.1} parent=1 // pred_check_branch
      %139 = sbr.rel (0) target = $region29
    $region28: #{tpu_custom_call.1} parent=1 // pred_region
      %140 = dma.done [#allocation4], 128
    $region29: #{tpu_custom_call.1} parent=1 // pred_fallthru
      _
    %141 = vsyncpa [#allocation3], 1
    %142 = vsyncpa [#allocation6], 1
    %143 = vsyncpa [#allocation4], 1

</llo_original>
